<compile_context>
chip_gen: v6e
topology: v6e:2x2x1
jax: 0.10.0
libtpu: 0.0.40
codegen_flags: <defaults>
</compile_context>

<pallas_src>
import functools

import jax
import jax.numpy as jnp
from jax.experimental import pallas as pl
from jax.experimental.pallas import tpu as pltpu


_TILE_N = 32768  # lanes per grid step for the scalar features (formants use 4x)


def _build_kernel(p_s, p_b, f_s, f_b, t_s, t_b, c_s, c_b, e_s, e_b,
                  tilt_clip_lo, tilt_clip_hi):
    """Build the normaliser kernel with all constants baked in as closures."""

    def kernel(p_ref, f_ref, t_ref, c_ref, e_ref,
               po_ref, fo_ref, to_ref, co_ref, eo_ref):
        # ---- scalar features: x * scale + bias (divide folded on host) ----
        po_ref[...] = (p_ref[...].astype(jnp.float32) * p_s + p_b).astype(po_ref.dtype)

        t = jnp.clip(t_ref[...].astype(jnp.float32), tilt_clip_lo, tilt_clip_hi)
        to_ref[...] = (t * t_s + t_b).astype(to_ref.dtype)

        co_ref[...] = (c_ref[...].astype(jnp.float32) * c_s + c_b).astype(co_ref.dtype)
        eo_ref[...] = (e_ref[...].astype(jnp.float32) * e_s + e_b).astype(eo_ref.dtype)

        # ---- formants: lane index mod 4 selects the per-formant scale/bias ----
        f = f_ref[...].astype(jnp.float32)
        lane = jax.lax.broadcasted_iota(jnp.int32, f.shape, dimension=1)
        idx = lane % 4
        scale = jnp.where(idx == 0, f_s[0],
                jnp.where(idx == 1, f_s[1],
                jnp.where(idx == 2, f_s[2], f_s[3]))).astype(jnp.float32)
        bias = jnp.where(idx == 0, f_b[0],
               jnp.where(idx == 1, f_b[1],
               jnp.where(idx == 2, f_b[2], f_b[3]))).astype(jnp.float32)
        fo_ref[...] = (f * scale + bias).astype(fo_ref.dtype)

    return kernel


def _affine(upper, lower):
    """Return (scale, bias) such that 2*(x-lower)/(upper-lower)-1 == x*scale+bias."""
    denom = float(upper) - float(lower)
    scale = 2.0 / denom
    bias = -2.0 * float(lower) / denom - 1.0
    return scale, bias


class NormaliserPallas:
    """JAX/Pallas port of the PyTorch Normaliser module (forward pass)."""

    def __init__(self, sample_rate, pitch_lims=None, formant_lims=None,
                 tilt_lims=None, centroid_lims=None, energy_lims=None):
        self.sample_rate = sample_rate
        if pitch_lims is not None:
            p_lo, p_hi = pitch_lims
        else:
            p_lo, p_hi = 3.9, 7.3
        if formant_lims is not None:
            (f1l, f1u, f2l, f2u, f3l, f3u, f4l, f4u) = formant_lims
        else:
            f1l, f1u = 200.0, 900.0
            f2l, f2u = 550.0, 2450.0
            f3l, f3u = 2200.0, 2950.0
            f4l, f4u = 3000.0, 4000.0
        if tilt_lims is not None:
            t_lo, t_hi = tilt_lims
        else:
            t_lo, t_hi = -1.0, -0.9
        if centroid_lims is not None:
            c_lo, c_hi = centroid_lims
        else:
            c_lo, c_hi = 0.0, sample_rate / 2
        if energy_lims is not None:
            e_lo, e_hi = energy_lims
        else:
            e_lo, e_hi = -60.0, 30.0

        p_s, p_b = _affine(p_hi, p_lo)
        f1s, f1b = _affine(f1u, f1l)
        f2s, f2b = _affine(f2u, f2l)
        f3s, f3b = _affine(f3u, f3l)
        f4s, f4b = _affine(f4u, f4l)
        t_s, t_b = _affine(t_hi, t_lo)
        c_s, c_b = _affine(c_hi, c_lo)
        e_s, e_b = _affine(e_hi, e_lo)

        # Clamp bounds for tilt are hardcoded in the PyTorch reference
        # (torch.clamp(tilt, -1, -0.85)) regardless of tilt_lims.
        self._kernel = _build_kernel(
            p_s, p_b,
            (f1s, f2s, f3s, f4s), (f1b, f2b, f3b, f4b),
            t_s, t_b, c_s, c_b, e_s, e_b,
            tilt_clip_lo=-1.0, tilt_clip_hi=-0.85,
        )

    @functools.partial(jax.jit, static_argnums=0)
    def __call__(self, pitch, formants, tilt, centroid, energy):
        # pitch/tilt/centroid/energy: (B, T); formants: (B, T, 4)
        B, T = pitch.shape
        N = B * T

        # Free, contiguous reshapes into lane-dense (1, lanes) slabs.
        pitch_f = pitch.reshape(1, N)
        tilt_f = tilt.reshape(1, N)
        cent_f = centroid.reshape(1, N)
        ener_f = energy.reshape(1, N)
        form_f = formants.reshape(1, 4 * N)

        # Lane tiling: full array if small, else large 128-aligned tiles.
        if N <= _TILE_N:
            tile_n = N
        else:
            tile_n = _TILE_N
        grid = (pl.cdiv(N, tile_n),)

        scalar_spec = pl.BlockSpec((1, tile_n), lambda i: (0, i))
        formant_spec = pl.BlockSpec((1, 4 * tile_n), lambda i: (0, i))

        out = pl.pallas_call(
            self._kernel,
            grid=grid,
            out_shape=(
                jax.ShapeDtypeStruct((1, N), pitch.dtype),
                jax.ShapeDtypeStruct((1, 4 * N), formants.dtype),
                jax.ShapeDtypeStruct((1, N), tilt.dtype),
                jax.ShapeDtypeStruct((1, N), centroid.dtype),
                jax.ShapeDtypeStruct((1, N), energy.dtype),
            ),
            in_specs=[scalar_spec, formant_spec, scalar_spec,
                      scalar_spec, scalar_spec],
            out_specs=[scalar_spec, formant_spec, scalar_spec,
                       scalar_spec, scalar_spec],
            compiler_params=pltpu.CompilerParams(
                dimension_semantics=("parallel",)),
        )(pitch_f, form_f, tilt_f, cent_f, ener_f)

        p_o, f_o, t_o, c_o, e_o = out
        return (
            p_o.reshape(B, T),
            f_o.reshape(B, T, 4),
            t_o.reshape(B, T),
            c_o.reshape(B, T),
            e_o.reshape(B, T),
        )


def _scale_ref(x, upper, lower):
    return 2.0 * (x - lower) / (upper - lower) - 1.0


if __name__ == "__main__":
    key = jax.random.PRNGKey(0)
    B, T = 2, 16
    sample_rate = 16000

    k1, k2, k3, k4, k5 = jax.random.split(key, 5)
    pitch = 3.9 + 3.4 * jax.random.uniform(k1, (B, T), jnp.float32)
    formants = jnp.stack(
        [
            200.0 + 700.0 * jax.random.uniform(k2, (B, T), jnp.float32),
            550.0 + 1900.0 * jax.random.uniform(k3, (B, T), jnp.float32),
            2200.0 + 750.0 * jax.random.uniform(k4, (B, T), jnp.float32),
            3000.0 + 1000.0 * jax.random.uniform(k5, (B, T), jnp.float32),
        ],
        axis=-1,
    )  # (B, T, 4)
    tilt = -1.2 + 0.5 * jax.random.uniform(jax.random.fold_in(key, 10), (B, T), jnp.float32)
    centroid = sample_rate / 2 * jax.random.uniform(jax.random.fold_in(key, 11), (B, T), jnp.float32)
    energy = -60.0 + 90.0 * jax.random.uniform(jax.random.fold_in(key, 12), (B, T), jnp.float32)

    norm = NormaliserPallas(sample_rate)
    outs = norm(pitch, formants, tilt, centroid, energy)
    outs = jax.block_until_ready(outs)
    p_o, f_o, t_o, c_o, e_o = outs

    # Reference (plain JAX) check, mirroring the PyTorch forward exactly.
    p_r = _scale_ref(pitch, 7.3, 3.9)
    f_r = jnp.stack(
        [
            _scale_ref(formants[..., 0], 900.0, 200.0),
            _scale_ref(formants[..., 1], 2450.0, 550.0),
            _scale_ref(formants[..., 2], 2950.0, 2200.0),
            _scale_ref(formants[..., 3], 4000.0, 3000.0),
        ],
        axis=-1,
    )
    t_r = _scale_ref(jnp.clip(tilt, -1.0, -0.85), -0.9, -1.0)
    c_r = _scale_ref(centroid, sample_rate / 2, 0.0)
    e_r = _scale_ref(energy, 30.0, -60.0)

    assert jnp.allclose(p_o, p_r, atol=1e-5), "pitch mismatch"
    assert jnp.allclose(f_o, f_r, atol=1e-5), "formants mismatch"
    assert jnp.allclose(t_o, t_r, atol=1e-5), "tilt mismatch"
    assert jnp.allclose(c_o, c_r, atol=1e-5), "centroid mismatch"
    assert jnp.allclose(e_o, e_r, atol=1e-5), "energy mismatch"

    print("KERNEL_OK")
</pallas_src>

<mosaic_0001>
module attributes {stable_mosaic.version = 11 : i64} {
  func.func @kernel(%arg0: i32, %arg1: memref<1x32xf32, #tpu.memory_space<vmem>>, %arg2: memref<1x128xf32, #tpu.memory_space<vmem>>, %arg3: memref<1x32xf32, #tpu.memory_space<vmem>>, %arg4: memref<1x32xf32, #tpu.memory_space<vmem>>, %arg5: memref<1x32xf32, #tpu.memory_space<vmem>>, %arg6: memref<1x32xf32, #tpu.memory_space<vmem>>, %arg7: memref<1x128xf32, #tpu.memory_space<vmem>>, %arg8: memref<1x32xf32, #tpu.memory_space<vmem>>, %arg9: memref<1x32xf32, #tpu.memory_space<vmem>>, %arg10: memref<1x32xf32, #tpu.memory_space<vmem>>) attributes {dimension_semantics = [#tpu.dimension_semantics<parallel>], iteration_bounds = array<i64: 1>, scalar_prefetch = 0 : i64, scratch_operands = 0 : i64, tpu.core_type = #tpu.core_type<tc>, window_params = [{transform_indices = @transform_0, window_bounds = array<i64: 1, 32>}, {transform_indices = @transform_1, window_bounds = array<i64: 1, 128>}, {transform_indices = @transform_2, window_bounds = array<i64: 1, 32>}, {transform_indices = @transform_3, window_bounds = array<i64: 1, 32>}, {transform_indices = @transform_4, window_bounds = array<i64: 1, 32>}, {transform_indices = @transform_5, window_bounds = array<i64: 1, 32>}, {transform_indices = @transform_6, window_bounds = array<i64: 1, 128>}, {transform_indices = @transform_7, window_bounds = array<i64: 1, 32>}, {transform_indices = @transform_8, window_bounds = array<i64: 1, 32>}, {transform_indices = @transform_9, window_bounds = array<i64: 1, 32>}]} {
    %c0 = arith.constant 0 : index
    %c0_0 = arith.constant 0 : index
    %0 = vector.load %arg1[%c0, %c0_0] : memref<1x32xf32, #tpu.memory_space<vmem>>, vector<1x32xf32>
    %cst = arith.constant 0.588235319 : f32
    %1 = vector.broadcast %cst : f32 to vector<1x32xf32>
    %2 = arith.mulf %0, %1 : vector<1x32xf32>
    %cst_1 = arith.constant -3.29411769 : f32
    %3 = vector.broadcast %cst_1 : f32 to vector<1x32xf32>
    %4 = arith.addf %2, %3 : vector<1x32xf32>
    %c0_2 = arith.constant 0 : index
    %c0_3 = arith.constant 0 : index
    %5 = vector.load %arg6[%c0_2, %c0_3] : memref<1x32xf32, #tpu.memory_space<vmem>>, vector<1x32xf32>
    tpu.vector_store %arg6[%c0_2, %c0_3], %4 {strides = array<i32>} : memref<1x32xf32, #tpu.memory_space<vmem>>, vector<1x32xf32>,
    %c0_4 = arith.constant 0 : index
    %c0_5 = arith.constant 0 : index
    %6 = vector.load %arg3[%c0_4, %c0_5] : memref<1x32xf32, #tpu.memory_space<vmem>>, vector<1x32xf32>
    %cst_6 = arith.constant -1.000000e+00 : f32
    %cst_7 = arith.constant -8.500000e-01 : f32
    %7 = vector.broadcast %cst_6 : f32 to vector<1x32xf32>
    %8 = arith.maximumf %7, %6 : vector<1x32xf32>
    %9 = vector.broadcast %cst_7 : f32 to vector<1x32xf32>
    %10 = arith.minimumf %9, %8 : vector<1x32xf32>
    %cst_8 = arith.constant 2.000000e+01 : f32
    %11 = vector.broadcast %cst_8 : f32 to vector<1x32xf32>
    %12 = arith.mulf %10, %11 : vector<1x32xf32>
    %cst_9 = arith.constant 1.900000e+01 : f32
    %13 = vector.broadcast %cst_9 : f32 to vector<1x32xf32>
    %14 = arith.addf %12, %13 : vector<1x32xf32>
    %c0_10 = arith.constant 0 : index
    %c0_11 = arith.constant 0 : index
    %15 = vector.load %arg8[%c0_10, %c0_11] : memref<1x32xf32, #tpu.memory_space<vmem>>, vector<1x32xf32>
    tpu.vector_store %arg8[%c0_10, %c0_11], %14 {strides = array<i32>} : memref<1x32xf32, #tpu.memory_space<vmem>>, vector<1x32xf32>,
    %c0_12 = arith.constant 0 : index
    %c0_13 = arith.constant 0 : index
    %16 = vector.load %arg4[%c0_12, %c0_13] : memref<1x32xf32, #tpu.memory_space<vmem>>, vector<1x32xf32>
    %cst_14 = arith.constant 2.500000e-04 : f32
    %17 = vector.broadcast %cst_14 : f32 to vector<1x32xf32>
    %18 = arith.mulf %16, %17 : vector<1x32xf32>
    %cst_15 = arith.constant -1.000000e+00 : f32
    %19 = vector.broadcast %cst_15 : f32 to vector<1x32xf32>
    %20 = arith.addf %18, %19 : vector<1x32xf32>
    %c0_16 = arith.constant 0 : index
    %c0_17 = arith.constant 0 : index
    %21 = vector.load %arg9[%c0_16, %c0_17] : memref<1x32xf32, #tpu.memory_space<vmem>>, vector<1x32xf32>
    tpu.vector_store %arg9[%c0_16, %c0_17], %20 {strides = array<i32>} : memref<1x32xf32, #tpu.memory_space<vmem>>, vector<1x32xf32>,
    %c0_18 = arith.constant 0 : index
    %c0_19 = arith.constant 0 : index
    %22 = vector.load %arg5[%c0_18, %c0_19] : memref<1x32xf32, #tpu.memory_space<vmem>>, vector<1x32xf32>
    %cst_20 = arith.constant 0.0222222228 : f32
    %23 = vector.broadcast %cst_20 : f32 to vector<1x32xf32>
    %24 = arith.mulf %22, %23 : vector<1x32xf32>
    %cst_21 = arith.constant 0.333333343 : f32
    %25 = vector.broadcast %cst_21 : f32 to vector<1x32xf32>
    %26 = arith.addf %24, %25 : vector<1x32xf32>
    %c0_22 = arith.constant 0 : index
    %c0_23 = arith.constant 0 : index
    %27 = vector.load %arg10[%c0_22, %c0_23] : memref<1x32xf32, #tpu.memory_space<vmem>>, vector<1x32xf32>
    tpu.vector_store %arg10[%c0_22, %c0_23], %26 {strides = array<i32>} : memref<1x32xf32, #tpu.memory_space<vmem>>, vector<1x32xf32>,
    %c0_24 = arith.constant 0 : index
    %c0_25 = arith.constant 0 : index
    %28 = vector.load %arg2[%c0_24, %c0_25] : memref<1x128xf32, #tpu.memory_space<vmem>>, vector<1x128xf32>
    %29 = tpu.iota {dimensions = array<i32: 1>} : vector<1x128xi32>
    %c4_i32 = arith.constant 4 : i32
    %c0_i32 = arith.constant 0 : i32
    %30 = arith.cmpi eq, %c4_i32, %c0_i32 : i32
    %c1_i32 = arith.constant 1 : i32
    %31 = arith.select %30, %c1_i32, %c4_i32 : i32
    %32 = vector.broadcast %31 : i32 to vector<1x128xi32>
    %33 = arith.remsi %29, %32 : vector<1x128xi32>
    %c0_i32_26 = arith.constant 0 : i32
    %34 = vector.broadcast %c0_i32_26 : i32 to vector<1x128xi32>
    %35 = arith.cmpi ne, %33, %34 : vector<1x128xi32>
    %c0_i32_27 = arith.constant 0 : i32
    %36 = vector.broadcast %c0_i32_27 : i32 to vector<1x128xi32>
    %37 = arith.cmpi slt, %33, %36 : vector<1x128xi32>
    %c0_i32_28 = arith.constant 0 : i32
    %38 = arith.cmpi slt, %31, %c0_i32_28 : i32
    %39 = vector.broadcast %38 : i1 to vector<1x128xi1>
    %40 = vector.broadcast %39 : vector<1x128xi1> to vector<1x128xi1>
    %41 = arith.xori %37, %40 : vector<1x128xi1>
    %42 = arith.andi %41, %35 : vector<1x128xi1>
    %43 = vector.broadcast %31 : i32 to vector<1x128xi32>
    %44 = arith.addi %33, %43 : vector<1x128xi32>
    %45 = arith.select %42, %44, %33 : vector<1x128xi1>, vector<1x128xi32>
    %c0_i32_29 = arith.constant 0 : i32
    %46 = vector.broadcast %c0_i32_29 : i32 to vector<1x128xi32>
    %47 = arith.cmpi eq, %45, %46 : vector<1x128xi32>
    %c1_i32_30 = arith.constant 1 : i32
    %48 = vector.broadcast %c1_i32_30 : i32 to vector<1x128xi32>
    %49 = arith.cmpi eq, %45, %48 : vector<1x128xi32>
    %c2_i32 = arith.constant 2 : i32
    %50 = vector.broadcast %c2_i32 : i32 to vector<1x128xi32>
    %51 = arith.cmpi eq, %45, %50 : vector<1x128xi32>
    %cst_31 = arith.constant 0.00266666664 : f32
    %cst_32 = arith.constant 2.000000e-03 : f32
    %52 = vector.broadcast %cst_31 : f32 to vector<1x128xf32>
    %53 = vector.broadcast %cst_32 : f32 to vector<1x128xf32>
    %54 = arith.select %51, %52, %53 : vector<1x128xi1>, vector<1x128xf32>
    %cst_33 = arith.constant 0.00105263153 : f32
    %55 = vector.broadcast %cst_33 : f32 to vector<1x128xf32>
    %56 = arith.select %49, %55, %54 : vector<1x128xi1>, vector<1x128xf32>
    %cst_34 = arith.constant 0.00285714283 : f32
    %57 = vector.broadcast %cst_34 : f32 to vector<1x128xf32>
    %58 = arith.select %47, %57, %56 : vector<1x128xi1>, vector<1x128xf32>
    %c0_i32_35 = arith.constant 0 : i32
    %59 = vector.broadcast %c0_i32_35 : i32 to vector<1x128xi32>
    %60 = arith.cmpi eq, %45, %59 : vector<1x128xi32>
    %c1_i32_36 = arith.constant 1 : i32
    %61 = vector.broadcast %c1_i32_36 : i32 to vector<1x128xi32>
    %62 = arith.cmpi eq, %45, %61 : vector<1x128xi32>
    %c2_i32_37 = arith.constant 2 : i32
    %63 = vector.broadcast %c2_i32_37 : i32 to vector<1x128xi32>
    %64 = arith.cmpi eq, %45, %63 : vector<1x128xi32>
    %cst_38 = arith.constant -6.86666679 : f32
    %cst_39 = arith.constant -7.000000e+00 : f32
    %65 = vector.broadcast %cst_38 : f32 to vector<1x128xf32>
    %66 = vector.broadcast %cst_39 : f32 to vector<1x128xf32>
    %67 = arith.select %64, %65, %66 : vector<1x128xi1>, vector<1x128xf32>
    %cst_40 = arith.constant -1.57894742 : f32
    %68 = vector.broadcast %cst_40 : f32 to vector<1x128xf32>
    %69 = arith.select %62, %68, %67 : vector<1x128xi1>, vector<1x128xf32>
    %cst_41 = arith.constant -1.57142854 : f32
    %70 = vector.broadcast %cst_41 : f32 to vector<1x128xf32>
    %71 = arith.select %60, %70, %69 : vector<1x128xi1>, vector<1x128xf32>
    %72 = arith.mulf %28, %58 : vector<1x128xf32>
    %73 = arith.addf %72, %71 : vector<1x128xf32>
    %c0_42 = arith.constant 0 : index
    %c0_43 = arith.constant 0 : index
    %74 = vector.load %arg7[%c0_42, %c0_43] : memref<1x128xf32, #tpu.memory_space<vmem>>, vector<1x128xf32>
    tpu.vector_store %arg7[%c0_42, %c0_43], %73 {strides = array<i32>} : memref<1x128xf32, #tpu.memory_space<vmem>>, vector<1x128xf32>,
    return
  }
  func.func @transform_0(%arg0: i32) -> (i32, i32) {
    %c0_i32 = arith.constant 0 : i32
    %c0_i32_0 = arith.constant 0 : i32
    return %c0_i32, %arg0 : i32, i32
  }
  func.func @transform_1(%arg0: i32) -> (i32, i32) {
    %c0_i32 = arith.constant 0 : i32
    %c0_i32_0 = arith.constant 0 : i32
    return %c0_i32, %arg0 : i32, i32
  }
  func.func @transform_2(%arg0: i32) -> (i32, i32) {
    %c0_i32 = arith.constant 0 : i32
    %c0_i32_0 = arith.constant 0 : i32
    return %c0_i32, %arg0 : i32, i32
  }
  func.func @transform_3(%arg0: i32) -> (i32, i32) {
    %c0_i32 = arith.constant 0 : i32
    %c0_i32_0 = arith.constant 0 : i32
    return %c0_i32, %arg0 : i32, i32
  }
  func.func @transform_4(%arg0: i32) -> (i32, i32) {
    %c0_i32 = arith.constant 0 : i32
    %c0_i32_0 = arith.constant 0 : i32
    return %c0_i32, %arg0 : i32, i32
  }
  func.func @transform_5(%arg0: i32) -> (i32, i32) {
    %c0_i32 = arith.constant 0 : i32
    %c0_i32_0 = arith.constant 0 : i32
    return %c0_i32, %arg0 : i32, i32
  }
  func.func @transform_6(%arg0: i32) -> (i32, i32) {
    %c0_i32 = arith.constant 0 : i32
    %c0_i32_0 = arith.constant 0 : i32
    return %c0_i32, %arg0 : i32, i32
  }
  func.func @transform_7(%arg0: i32) -> (i32, i32) {
    %c0_i32 = arith.constant 0 : i32
    %c0_i32_0 = arith.constant 0 : i32
    return %c0_i32, %arg0 : i32, i32
  }
  func.func @transform_8(%arg0: i32) -> (i32, i32) {
    %c0_i32 = arith.constant 0 : i32
    %c0_i32_0 = arith.constant 0 : i32
    return %c0_i32, %arg0 : i32, i32
  }
  func.func @transform_9(%arg0: i32) -> (i32, i32) {
    %c0_i32 = arith.constant 0 : i32
    %c0_i32_0 = arith.constant 0 : i32
    return %c0_i32, %arg0 : i32, i32
  }
}

</mosaic_0001>

<llo_original>
// kernel: a_call__.1
$region0: #{a_call__.1}
  #allocation0 [shape = 'u32[]', space=smem, size = 0x4, offset = 0x4, fixed_abs, tag = 'smem constant byte address 0x4 - core index']
  #allocation1 [shape = 'u32[144,128]{1,0:T(1,128)}', space=vmem, size = 0x12000, scoped, tag = 'internal scratch']
  %s0 = inlined_call_operand.vmem [shape: f32[1,32], index: 0, kind: input, shape index: {}]
  %s1 = inlined_call_operand.vmem [shape: f32[1,128], index: 1, kind: input, shape index: {}]
  %s2 = inlined_call_operand.vmem [shape: f32[1,32], index: 2, kind: input, shape index: {}]
  %s3 = inlined_call_operand.vmem [shape: f32[1,32], index: 3, kind: input, shape index: {}]
  %s4 = inlined_call_operand.vmem [shape: f32[1,32], index: 4, kind: input, shape index: {}]
  %s5 = inlined_call_operand.vmem [shape: f32[1,32], index: 5, kind: output, shape index: {0}]
  %s6 = inlined_call_operand.vmem [shape: f32[1,128], index: 6, kind: output, shape index: {1}]
  %s7 = inlined_call_operand.vmem [shape: f32[1,32], index: 7, kind: output, shape index: {2}]
  %s8 = inlined_call_operand.vmem [shape: f32[1,32], index: 8, kind: output, shape index: {3}]
  %s9 = inlined_call_operand.vmem [shape: f32[1,32], index: 9, kind: output, shape index: {4}]
  %10 = xla_tuple %s5, %s6, %s7, %s8, %s9
  %s11 = sld [smem:[#allocation0]]
  $region62: #{a_call__.1} parent=0
    _
  %s13 = ssub.s32 1, %s11
  %s14 = scalar_select 0, %s13, %s11
  // Predicated region
  $region2: #{a_call__.1} parent=0 // pred_check
    _
  $region3: #{a_call__.1} parent=0 // pred_check_branch
    %16 = sbr.rel (0) target = $region5
  $region4: #{a_call__.1} parent=0 // pred_region
    _
  $region5: #{a_call__.1} parent=0 // pred_fallthru
    _
  // Predicated region
  $region6: #{a_call__.1} parent=0 // pred_check
    _
  $region7: #{a_call__.1} parent=0 // pred_check_branch
    %18 = sbr.rel (0) target = $region9
  $region8: #{a_call__.1} parent=0 // pred_region
    _
  $region9: #{a_call__.1} parent=0 // pred_fallthru
    _
  // Predicated region
  $region10: #{a_call__.1} parent=0 // pred_check
    _
  $region11: #{a_call__.1} parent=0 // pred_check_branch
    %20 = sbr.rel (0) target = $region13
  $region12: #{a_call__.1} parent=0 // pred_region
    _
  $region13: #{a_call__.1} parent=0 // pred_fallthru
    _
  // Predicated region
  $region14: #{a_call__.1} parent=0 // pred_check
    _
  $region15: #{a_call__.1} parent=0 // pred_check_branch
    %22 = sbr.rel (0) target = $region17
  $region16: #{a_call__.1} parent=0 // pred_region
    _
  $region17: #{a_call__.1} parent=0 // pred_fallthru
    _
  // Predicated region
  $region18: #{a_call__.1} parent=0 // pred_check
    _
  $region19: #{a_call__.1} parent=0 // pred_check_branch
    %24 = sbr.rel (0) target = $region21
  $region20: #{a_call__.1} parent=0 // pred_region
    _
  $region21: #{a_call__.1} parent=0 // pred_fallthru
    _
  %v25 = vld [vmem:[%s0] sm:$0x1]
  %v26 = vmul.f32 %v25, 0.5882353
  %v27 = vadd.f32 %v26, -3.2941177
  %vm28 = vcmask 253952
  %29 = vst.msk [vmem:[%s5] sm:$0x1] %vm28, %v27
  %v30 = vld [vmem:[%s2] sm:$0x1]
  %v31 = vmax.f32 %v30, -1.0
  %v32 = vmin.f32 %v31, -0.85
  %v33 = vmul.f32 %v32, 20.0
  %v34 = vadd.f32 %v33, 19.0
  %35 = vst.msk [vmem:[%s7] sm:$0x1] %vm28, %v34
  %v36 = vld [vmem:[%s3] sm:$0x1]
  %v37 = vmul.f32 %v36, 0.00025
  %v38 = vadd.f32 %v37, -1.0
  %39 = vst.msk [vmem:[%s8] sm:$0x1] %vm28, %v38
  %v40 = vld [vmem:[%s4] sm:$0x1]
  %v41 = vmul.f32 %v40, 0.022222223
  %v42 = vadd.f32 %v41, 0.33333334
  %43 = vst.msk [vmem:[%s9] sm:$0x1] %vm28, %v42
  %v44 = vld [vmem:[%s1] sm:$0x1]
  %v45 = vlaneseq
  %v46 = vand.u32 %v45, 127
  %vm47 = vcmp.lt.s32.totalorder %v46, 0
  %v48 = vsub.s32 0, %v46
  %v49 = vsel %vm47, %v48, %v46
  %v50 = vshrl.u32 %v49, 2
  %v51 = vand.u32 %v49, 3
  %v52 = vsub.s32 0, %v51
  %v53 = vsel %vm47, %v52, %v51
  %vm54 = vcmp.ne.s32.totalorder %v53, 0
  %vm55 = vcmp.lt.s32.totalorder %v53, 0
  %vm56 = vmand %vm55, %vm54
  %v57 = vadd.s32 %v53, 4
  %v58 = vsel %vm56, %v57, %v53
  %vm59 = vcmp.eq.s32.totalorder %v58, 0
  %vm60 = vcmp.eq.s32.totalorder %v58, 1
  %vm61 = vcmp.eq.s32.totalorder %v58, 2
  %v62 = vsel %vm61, 0.0026666666, 0.002
  %v63 = vsel %vm60, 0.0010526315, %v62
  %v64 = vsel %vm59, 0.0028571428, %v63
  %v65 = vsel %vm61, -6.866667, -7.0
  %v66 = vsel %vm60, -1.5789474, %v65
  %v67 = vsel %vm59, -1.5714285, %v66
  %v68 = vmul.f32 %v44, %v64
  %v69 = vadd.f32 %v68, %v67
  %70 = vst [vmem:[%s6] sm:$0x1] %v69
  // Predicated region
  $region22: #{a_call__.1} parent=0 // pred_check
    _
  $region23: #{a_call__.1} parent=0 // pred_check_branch
    %72 = sbr.rel (0) target = $region25
  $region24: #{a_call__.1} parent=0 // pred_region
    _
  $region25: #{a_call__.1} parent=0 // pred_fallthru
    _
  // Predicated region
  $region26: #{a_call__.1} parent=0 // pred_check
    _
  $region27: #{a_call__.1} parent=0 // pred_check_branch
    %74 = sbr.rel (0) target = $region29
  $region28: #{a_call__.1} parent=0 // pred_region
    _
  $region29: #{a_call__.1} parent=0 // pred_fallthru
    _
  // Predicated region
  $region30: #{a_call__.1} parent=0 // pred_check
    _
  $region31: #{a_call__.1} parent=0 // pred_check_branch
    %76 = sbr.rel (0) target = $region33
  $region32: #{a_call__.1} parent=0 // pred_region
    _
  $region33: #{a_call__.1} parent=0 // pred_fallthru
    _
  // Predicated region
  $region34: #{a_call__.1} parent=0 // pred_check
    _
  $region35: #{a_call__.1} parent=0 // pred_check_branch
    %78 = sbr.rel (0) target = $region37
  $region36: #{a_call__.1} parent=0 // pred_region
    _
  $region37: #{a_call__.1} parent=0 // pred_fallthru
    _
  // Predicated region
  $region38: #{a_call__.1} parent=0 // pred_check
    _
  $region39: #{a_call__.1} parent=0 // pred_check_branch
    %80 = sbr.rel (0) target = $region41
  $region40: #{a_call__.1} parent=0 // pred_region
    _
  $region41: #{a_call__.1} parent=0 // pred_fallthru
    _
  // Predicated region
  $region42: #{a_call__.1} parent=0 // pred_check
    _
  $region43: #{a_call__.1} parent=0 // pred_check_branch
    %82 = sbr.rel (0) target = $region45
  $region44: #{a_call__.1} parent=0 // pred_region
    _
  $region45: #{a_call__.1} parent=0 // pred_fallthru
    _
  // Predicated region
  $region46: #{a_call__.1} parent=0 // pred_check
    _
  $region47: #{a_call__.1} parent=0 // pred_check_branch
    %84 = sbr.rel (0) target = $region49
  $region48: #{a_call__.1} parent=0 // pred_region
    _
  $region49: #{a_call__.1} parent=0 // pred_fallthru
    _
  // Predicated region
  $region50: #{a_call__.1} parent=0 // pred_check
    _
  $region51: #{a_call__.1} parent=0 // pred_check_branch
    %86 = sbr.rel (0) target = $region53
  $region52: #{a_call__.1} parent=0 // pred_region
    _
  $region53: #{a_call__.1} parent=0 // pred_fallthru
    _
  // Predicated region
  $region54: #{a_call__.1} parent=0 // pred_check
    _
  $region55: #{a_call__.1} parent=0 // pred_check_branch
    %88 = sbr.rel (0) target = $region57
  $region56: #{a_call__.1} parent=0 // pred_region
    _
  $region57: #{a_call__.1} parent=0 // pred_fallthru
    _
  // Predicated region
  $region58: #{a_call__.1} parent=0 // pred_check
    _
  $region59: #{a_call__.1} parent=0 // pred_check_branch
    %90 = sbr.rel (0) target = $region61
  $region60: #{a_call__.1} parent=0 // pred_region
    _
  $region61: #{a_call__.1} parent=0 // pred_fallthru
    _

</llo_original>
